<compile_context>
chip_gen: v7x
topology: tpu7x:2x2x1
jax: 0.10.0
libtpu: 0.0.40
codegen_flags: <defaults>
</compile_context>

<pallas_src>
import math

import jax
import jax.numpy as jnp
from jax.experimental import pallas as pl
from jax.experimental.pallas import tpu as pltpu


def _flow_kernel(xt_ref, w1_ref, w2_ref, b2_ref, zt_ref, lp_ref):
    dim = xt_ref.shape[0]
    half = dim // 2
    n_flows = w1_ref.shape[0]          # static, small
    mm_dtype = w1_ref.dtype            # f32 (default) or bf16 (fast MXU path)

    # Identity half passes straight through: no cast / f32 round-trip.
    zt_ref[:half, :] = xt_ref[:half, :]

    x1 = xt_ref[:half, :].astype(jnp.float32)    # (half, bm)
    x2 = xt_ref[half:, :].astype(jnp.float32)    # (half, bm)
    bm = x1.shape[1]

    # Layer-1 bias folded into W1: augment x1 with a ones row (loop-invariant,
    # built once). h = relu(W1 @ [x1; 1]) with W1 = [[W1s|W1t] | b1].
    x1_aug = jnp.concatenate([x1, jnp.ones((1, bm), jnp.float32)], axis=0)
    x1_aug = x1_aug.astype(mm_dtype)             # (half+1, bm)

    log_det = jnp.zeros((1, bm), jnp.float32)

    # n_flows is small & static -> unrolled Python loop (full LLO visibility).
    # TODO(synk): switch to lax.fori_loop(..., unroll=True) with dynamic weight
    # indexing if n_flows ever grows enough to pressure the 64-vreg file.
    for f in range(n_flows):
        # Fused layer 1 of both nets (bias accumulated on the MXU, not VALU).
        h = jnp.maximum(
            jnp.dot(w1_ref[f], x1_aug, preferred_element_type=jnp.float32),
            0.0)                                              # (2H, bm) f32
        # Fused layer 2 (block-diagonal): st = [W2s@h_s ; W2t@h_t] + [b2s;b2t]
        st = jnp.dot(w2_ref[f], h.astype(mm_dtype),
                     preferred_element_type=jnp.float32) + b2_ref[f]
        s = jnp.tanh(st[:half, :])                            # (half, bm) EUP
        t = st[half:, :]                                      # (half, bm)

        # Affine coupling: y2 = x2 * exp(s) + t ; log_det += sum(s)
        x2 = x2 * jnp.exp(s) + t
        log_det = log_det + jnp.sum(s, axis=0, keepdims=True)

    # TODO(synk): confirm in the bundle dump whether VALU (the (2H,bm) ReLU) or
    # the MXU feed/pop path binds; if MXU, replace the K=half+1 layer-1 dot
    # with a handful of VPU broadcast-MACs.
    zt_ref[half:, :] = x2.astype(zt_ref.dtype)

    # base_dist = N(0, I): log_prob(z) = -0.5*||z||^2 - (dim/2)*log(2*pi) + log_det
    sq = (jnp.sum(x1 * x1, axis=0, keepdims=True)
          + jnp.sum(x2 * x2, axis=0, keepdims=True))          # (1, bm) lane-dense
    lp_ref[...] = (-0.5 * sq
                   - 0.5 * dim * math.log(2.0 * math.pi)
                   + log_det).astype(lp_ref.dtype)


def _pack_params(params, mm_dtype=jnp.float32):
    """Fuse per-flow s/t weights into 2 matmuls per flow, in (out, in) layout.

    Layer-1 bias is folded into W1 as an extra input column so the kernel can
    apply it via an augmented ones row (MXU accumulates it for free).
    """
    w1s, b1s, w2s, b2s, w1t, b1t, w2t, b2t = params
    # layer 1: concat outputs of the two nets -> (nf, 2H, half), then append b1
    w1 = jnp.transpose(jnp.concatenate([w1s, w1t], axis=2), (0, 2, 1))
    b1 = jnp.transpose(jnp.concatenate([b1s, b1t], axis=2), (0, 2, 1))  # (nf,2H,1)
    w1 = jnp.concatenate([w1, b1], axis=2)                              # (nf,2H,half+1)
    # layer 2: block-diagonal -> (nf, dim, 2H)
    w2s_t = jnp.transpose(w2s, (0, 2, 1))       # (nf, half, hidden)
    w2t_t = jnp.transpose(w2t, (0, 2, 1))
    zeros = jnp.zeros_like(w2s_t)
    top = jnp.concatenate([w2s_t, zeros], axis=2)
    bot = jnp.concatenate([zeros, w2t_t], axis=2)
    w2 = jnp.concatenate([top, bot], axis=1)    # (nf, dim, 2H)
    b2 = jnp.transpose(jnp.concatenate([b2s, b2t], axis=2), (0, 2, 1))  # (nf,dim,1)
    # b2 stays f32 (added to the f32 accumulation); matmul operands may be bf16.
    return w1.astype(mm_dtype), w2.astype(mm_dtype), b2.astype(jnp.float32)


def _choose_block_batch(B):
    """Lane-aligned batch tile.

    Prefers the largest tile <= 4096 that still gives >= 2 grid steps (DMA
    pipelining + v7x dual-TensorCore sharding; even step counts preferred),
    falling back to a single full-batch tile when B is small.  The 4096 cap
    keeps the f32 temporaries (h is (2*hidden, bm)) plus double-buffered I/O
    tiles well under v5e's 16 MiB default scoped-VMEM limit at these sizes.
    TODO(synk): re-derive the cap if hidden_dim/dim grow (v7x has 64 MiB
    physical VMEM vs 128 MiB on v5e/v6e).
    """
    if B % 128 != 0:
        return B                       # single lane-masked tile (still correct)
    cands = [c for c in (4096, 2048, 1024, 512, 256, 128)
             if B % c == 0 and B // c >= 2]
    for c in cands:                    # prefer an even number of grid steps (v7x)
        if (B // c) % 2 == 0:
            return c
    return cands[0] if cands else B


def normalizing_flow_forward_t(xt, params, *, block_batch=None,
                               use_bf16_matmul=False):
    """Batch-on-lanes entry point: xt is (dim, B); returns (zt (dim,B), lp (B,)).

    Prefer this in graphs that already keep activations as (dim, B) — it avoids
    the HBM round-trip transposes of `normalizing_flow_forward`.
    """
    dim, B = xt.shape
    bm = _choose_block_batch(B) if block_batch is None else block_batch
    assert B % bm == 0
    grid = (B // bm,)

    mm_dtype = jnp.bfloat16 if use_bf16_matmul else jnp.float32
    w1, w2, b2 = _pack_params(params, mm_dtype)

    def _const_spec(a):
        # Weights are tiny and grid-invariant (constant index_map -> fetched
        # once, no per-step re-DMA).
        return pl.BlockSpec(a.shape, lambda i: (0,) * a.ndim)

    in_specs = [pl.BlockSpec((dim, bm), lambda i: (0, i))]
    for a in (w1, w2, b2):
        in_specs.append(_const_spec(a))

    out_specs = [pl.BlockSpec((dim, bm), lambda i: (0, i)),   # z^T, lane-dense
                 pl.BlockSpec((1, bm), lambda i: (0, i))]     # log_prob, lane-dense

    zt, lp = pl.pallas_call(
        _flow_kernel,
        grid_spec=pltpu.PrefetchScalarGridSpec(
            num_scalar_prefetch=0,
            grid=grid,
            in_specs=in_specs,
            out_specs=out_specs),
        out_shape=(jax.ShapeDtypeStruct((dim, B), xt.dtype),
                   jax.ShapeDtypeStruct((1, B), jnp.float32)),
        compiler_params=pltpu.CompilerParams(dimension_semantics=("parallel",)),
    )(xt, w1, w2, b2)

    return zt, lp[0]


def normalizing_flow_forward(x, params, *, block_batch=None,
                             use_bf16_matmul=False):
    """(B, dim)-interface wrapper matching NormalizingFlow.forward.

    TODO(synk): if the surrounding graph can keep activations as (dim, B),
    call normalizing_flow_forward_t directly and drop these two transposes
    (each is a full B*dim HBM read+write).
    """
    zt, lp = normalizing_flow_forward_t(jnp.transpose(x), params,
                                        block_batch=block_batch,
                                        use_bf16_matmul=use_bf16_matmul)
    return jnp.transpose(zt), lp


def init_params(key, dim, hidden_dim, n_flows):
    """Deterministic init mirroring nn.Linear default (uniform(±1/sqrt(fan_in))).

    Weights stored feature-major (n_flows, in_features, out_features); the
    wrapper re-packs them into the fused (out, in) kernel layout.
    """
    half = dim // 2

    def linear(k, fan_in, fan_out):
        kw, kb = jax.random.split(k)
        bound = 1.0 / math.sqrt(fan_in)
        w = jax.random.uniform(kw, (fan_in, fan_out), jnp.float32, -bound, bound)
        b = jax.random.uniform(kb, (1, fan_out), jnp.float32, -bound, bound)
        return w, b

    w1s, b1s, w2s, b2s = [], [], [], []
    w1t, b1t, w2t, b2t = [], [], [], []
    keys = jax.random.split(key, n_flows * 4)
    for f in range(n_flows):
        w, b = linear(keys[4 * f + 0], half, hidden_dim); w1s.append(w); b1s.append(b)
        w, b = linear(keys[4 * f + 1], hidden_dim, half); w2s.append(w); b2s.append(b)
        w, b = linear(keys[4 * f + 2], half, hidden_dim); w1t.append(w); b1t.append(b)
        w, b = linear(keys[4 * f + 3], hidden_dim, half); w2t.append(w); b2t.append(b)

    stack = lambda xs: jnp.stack(xs, axis=0)
    return (stack(w1s), stack(b1s), stack(w2s), stack(b2s),
            stack(w1t), stack(b1t), stack(w2t), stack(b2t))


def reference_forward(x, params):
    """Pure-JAX reference of the PyTorch module (for correctness check)."""
    w1s, b1s, w2s, b2s, w1t, b1t, w2t, b2t = params
    dim = x.shape[1]
    half = dim // 2
    x1, x2 = x[:, :half], x[:, half:]
    ld = jnp.zeros((x.shape[0],), jnp.float32)
    for f in range(w1s.shape[0]):
        s = jnp.tanh(jnp.maximum(x1 @ w1s[f] + b1s[f, 0], 0.0) @ w2s[f] + b2s[f, 0])
        t = jnp.maximum(x1 @ w1t[f] + b1t[f, 0], 0.0) @ w2t[f] + b2t[f, 0]
        x2 = x2 * jnp.exp(s) + t
        ld = ld + s.sum(axis=1)
    z = jnp.concatenate([x1, x2], axis=1)
    lp = -0.5 * jnp.sum(z * z, axis=1) - 0.5 * dim * math.log(2.0 * math.pi) + ld
    return z, lp


if __name__ == "__main__":
    dim, hidden_dim, n_flows, batch = 8, 32, 3, 512

    key = jax.random.PRNGKey(0)
    k_params, k_x = jax.random.split(key)
    params = init_params(k_params, dim, hidden_dim, n_flows)
    x = jax.random.normal(k_x, (batch, dim), jnp.float32)

    z_ref, lp_ref = reference_forward(x, params)

    # 1) default tiling (bm=256, 2-step grid), f32 matmul operands.
    z, log_prob = normalizing_flow_forward(x, params)
    jax.block_until_ready((z, log_prob))
    assert jnp.allclose(z, z_ref, atol=1e-3, rtol=1e-5), "z mismatch (default)"
    assert jnp.allclose(log_prob, lp_ref, atol=1e-3, rtol=1e-5), "lp mismatch (default)"

    # 2) explicit smaller tile -> 4-step grid (exercises the pipelined path).
    z2, lp2 = normalizing_flow_forward(x, params, block_batch=128)
    jax.block_until_ready((z2, lp2))
    assert jnp.allclose(z2, z_ref, atol=1e-3, rtol=1e-5), "z mismatch (tiled)"
    assert jnp.allclose(lp2, lp_ref, atol=1e-3, rtol=1e-5), "lp mismatch (tiled)"

    # 3) bf16 MXU-operand fast path (v6e/v7x native; f32 accumulation) — looser
    #    tolerances per bf16 mantissa.
    z3, lp3 = normalizing_flow_forward(x, params, use_bf16_matmul=True)
    jax.block_until_ready((z3, lp3))
    assert jnp.all(jnp.isfinite(z3)) and jnp.all(jnp.isfinite(lp3))
    assert jnp.allclose(z3, z_ref, atol=0.5, rtol=0.1), "z mismatch (bf16)"
    assert jnp.allclose(lp3, lp_ref, atol=3.0, rtol=0.1), "lp mismatch (bf16)"

    print("KERNEL_OK")
</pallas_src>

<mosaic_0001>
module attributes {stable_mosaic.version = 11 : i64} {
  func.func @_flow_kernel(%arg0: i32, %arg1: memref<8x256xf32, #tpu.memory_space<vmem>>, %arg2: memref<3x64x5xf32, #tpu.memory_space<vmem>>, %arg3: memref<3x8x64xf32, #tpu.memory_space<vmem>>, %arg4: memref<3x8x1xf32, #tpu.memory_space<vmem>>, %arg5: memref<8x256xf32, #tpu.memory_space<vmem>>, %arg6: memref<1x256xf32, #tpu.memory_space<vmem>>) attributes {dimension_semantics = [#tpu.dimension_semantics<parallel>], iteration_bounds = array<i64: 2>, scalar_prefetch = 0 : i64, scratch_operands = 0 : i64, tpu.core_type = #tpu.core_type<tc>, window_params = [{transform_indices = @transform_0, window_bounds = array<i64: 8, 256>}, {pipeline_mode = #tpu.pipeline_mode<synchronous>, transform_indices = @transform_1, window_bounds = array<i64: 3, 64, 5>}, {pipeline_mode = #tpu.pipeline_mode<synchronous>, transform_indices = @transform_2, window_bounds = array<i64: 3, 8, 64>}, {pipeline_mode = #tpu.pipeline_mode<synchronous>, transform_indices = @transform_3, window_bounds = array<i64: 3, 8, 1>}, {transform_indices = @transform_4, window_bounds = array<i64: 8, 256>}, {transform_indices = @transform_5, window_bounds = array<i64: 1, 256>}]} {
    %c0 = arith.constant 0 : index
    %c0_0 = arith.constant 0 : index
    %0 = vector.load %arg1[%c0, %c0_0] : memref<8x256xf32, #tpu.memory_space<vmem>>, vector<4x256xf32>
    %c0_1 = arith.constant 0 : index
    %c0_2 = arith.constant 0 : index
    %1 = vector.load %arg5[%c0_1, %c0_2] : memref<8x256xf32, #tpu.memory_space<vmem>>, vector<4x256xf32>
    tpu.vector_store %arg5[%c0_1, %c0_2], %0 {strides = array<i32>} : memref<8x256xf32, #tpu.memory_space<vmem>>, vector<4x256xf32>,
    %c0_3 = arith.constant 0 : index
    %c0_4 = arith.constant 0 : index
    %2 = vector.load %arg1[%c0_3, %c0_4] : memref<8x256xf32, #tpu.memory_space<vmem>>, vector<4x256xf32>
    %c4 = arith.constant 4 : index
    %c0_5 = arith.constant 0 : index
    %3 = vector.load %arg1[%c4, %c0_5] : memref<8x256xf32, #tpu.memory_space<vmem>>, vector<4x256xf32>
    %cst = arith.constant 1.000000e+00 : f32
    %4 = vector.broadcast %cst : f32 to vector<1x256xf32>
    %5 = tpu.concatenate %2, %4 in 0 : vector<4x256xf32>, vector<1x256xf32> -> vector<5x256xf32>
    %cst_6 = arith.constant 0.000000e+00 : f32
    %6 = vector.broadcast %cst_6 : f32 to vector<1x256xf32>
    %c0_7 = arith.constant 0 : index
    %c0_8 = arith.constant 0 : index
    %c0_9 = arith.constant 0 : index
    %7 = vector.load %arg2[%c0_7, %c0_8, %c0_9] : memref<3x64x5xf32, #tpu.memory_space<vmem>>, vector<1x64x5xf32>
    %8 = vector.shape_cast %7 : vector<1x64x5xf32> to vector<64x5xf32>
    %cst_10 = arith.constant dense<0.000000e+00> : vector<64x256xf32>
    %9 = tpu.matmul %8, %5, %cst_10 {dimension_numbers = #tpu.dot_dimension_numbers<[1], [0], [0], [1], [0, 0, 1, 1], [], []>} : vector<64x5xf32>, vector<5x256xf32>, vector<64x256xf32> -> vector<64x256xf32>
    %cst_11 = arith.constant 0.000000e+00 : f32
    %10 = vector.broadcast %cst_11 : f32 to vector<64x256xf32>
    %11 = arith.maximumf %9, %10 : vector<64x256xf32>
    %c0_12 = arith.constant 0 : index
    %c0_13 = arith.constant 0 : index
    %c0_14 = arith.constant 0 : index
    %12 = vector.load %arg3[%c0_12, %c0_13, %c0_14] : memref<3x8x64xf32, #tpu.memory_space<vmem>>, vector<1x8x64xf32>
    %13 = vector.shape_cast %12 : vector<1x8x64xf32> to vector<8x64xf32>
    %cst_15 = arith.constant dense<0.000000e+00> : vector<8x256xf32>
    %14 = tpu.matmul %13, %11, %cst_15 {dimension_numbers = #tpu.dot_dimension_numbers<[1], [0], [0], [1], [0, 0, 1, 1], [], []>} : vector<8x64xf32>, vector<64x256xf32>, vector<8x256xf32> -> vector<8x256xf32>
    %c0_16 = arith.constant 0 : index
    %c0_17 = arith.constant 0 : index
    %c0_18 = arith.constant 0 : index
    %15 = vector.load %arg4[%c0_16, %c0_17, %c0_18] : memref<3x8x1xf32, #tpu.memory_space<vmem>>, vector<1x8x1xf32>
    %16 = vector.shape_cast %15 : vector<1x8x1xf32> to vector<8x1xf32>
    %17 = vector.broadcast %16 : vector<8x1xf32> to vector<8x256xf32>
    %18 = arith.addf %14, %17 : vector<8x256xf32>
    %19 = vector.extract_strided_slice %18 {offsets = [0, 0], sizes = [4, 256], strides = [1, 1]} : vector<8x256xf32> to vector<4x256xf32>
    %20 = math.tanh %19 : vector<4x256xf32>
    %21 = vector.extract_strided_slice %18 {offsets = [4, 0], sizes = [4, 256], strides = [1, 1]} : vector<8x256xf32> to vector<4x256xf32>
    %22 = math.exp %20 : vector<4x256xf32>
    %23 = arith.mulf %3, %22 : vector<4x256xf32>
    %24 = arith.addf %23, %21 : vector<4x256xf32>
    %cst_19 = arith.constant dense<0.000000e+00> : vector<256xf32>
    %25 = vector.multi_reduction <add>, %20, %cst_19 [0] : vector<4x256xf32> to vector<256xf32>
    %26 = vector.shape_cast %25 : vector<256xf32> to vector<1x256xf32>
    %27 = arith.addf %6, %26 : vector<1x256xf32>
    %c1 = arith.constant 1 : index
    %c0_20 = arith.constant 0 : index
    %c0_21 = arith.constant 0 : index
    %28 = vector.load %arg2[%c1, %c0_20, %c0_21] : memref<3x64x5xf32, #tpu.memory_space<vmem>>, vector<1x64x5xf32>
    %29 = vector.shape_cast %28 : vector<1x64x5xf32> to vector<64x5xf32>
    %cst_22 = arith.constant dense<0.000000e+00> : vector<64x256xf32>
    %30 = tpu.matmul %29, %5, %cst_22 {dimension_numbers = #tpu.dot_dimension_numbers<[1], [0], [0], [1], [0, 0, 1, 1], [], []>} : vector<64x5xf32>, vector<5x256xf32>, vector<64x256xf32> -> vector<64x256xf32>
    %cst_23 = arith.constant 0.000000e+00 : f32
    %31 = vector.broadcast %cst_23 : f32 to vector<64x256xf32>
    %32 = arith.maximumf %30, %31 : vector<64x256xf32>
    %c1_24 = arith.constant 1 : index
    %c0_25 = arith.constant 0 : index
    %c0_26 = arith.constant 0 : index
    %33 = vector.load %arg3[%c1_24, %c0_25, %c0_26] : memref<3x8x64xf32, #tpu.memory_space<vmem>>, vector<1x8x64xf32>
    %34 = vector.shape_cast %33 : vector<1x8x64xf32> to vector<8x64xf32>
    %cst_27 = arith.constant dense<0.000000e+00> : vector<8x256xf32>
    %35 = tpu.matmul %34, %32, %cst_27 {dimension_numbers = #tpu.dot_dimension_numbers<[1], [0], [0], [1], [0, 0, 1, 1], [], []>} : vector<8x64xf32>, vector<64x256xf32>, vector<8x256xf32> -> vector<8x256xf32>
    %c1_28 = arith.constant 1 : index
    %c0_29 = arith.constant 0 : index
    %c0_30 = arith.constant 0 : index
    %36 = vector.load %arg4[%c1_28, %c0_29, %c0_30] : memref<3x8x1xf32, #tpu.memory_space<vmem>>, vector<1x8x1xf32>
    %37 = vector.shape_cast %36 : vector<1x8x1xf32> to vector<8x1xf32>
    %38 = vector.broadcast %37 : vector<8x1xf32> to vector<8x256xf32>
    %39 = arith.addf %35, %38 : vector<8x256xf32>
    %40 = vector.extract_strided_slice %39 {offsets = [0, 0], sizes = [4, 256], strides = [1, 1]} : vector<8x256xf32> to vector<4x256xf32>
    %41 = math.tanh %40 : vector<4x256xf32>
    %42 = vector.extract_strided_slice %39 {offsets = [4, 0], sizes = [4, 256], strides = [1, 1]} : vector<8x256xf32> to vector<4x256xf32>
    %43 = math.exp %41 : vector<4x256xf32>
    %44 = arith.mulf %24, %43 : vector<4x256xf32>
    %45 = arith.addf %44, %42 : vector<4x256xf32>
    %cst_31 = arith.constant dense<0.000000e+00> : vector<256xf32>
    %46 = vector.multi_reduction <add>, %41, %cst_31 [0] : vector<4x256xf32> to vector<256xf32>
    %47 = vector.shape_cast %46 : vector<256xf32> to vector<1x256xf32>
    %48 = arith.addf %27, %47 : vector<1x256xf32>
    %c2 = arith.constant 2 : index
    %c0_32 = arith.constant 0 : index
    %c0_33 = arith.constant 0 : index
    %49 = vector.load %arg2[%c2, %c0_32, %c0_33] : memref<3x64x5xf32, #tpu.memory_space<vmem>>, vector<1x64x5xf32>
    %50 = vector.shape_cast %49 : vector<1x64x5xf32> to vector<64x5xf32>
    %cst_34 = arith.constant dense<0.000000e+00> : vector<64x256xf32>
    %51 = tpu.matmul %50, %5, %cst_34 {dimension_numbers = #tpu.dot_dimension_numbers<[1], [0], [0], [1], [0, 0, 1, 1], [], []>} : vector<64x5xf32>, vector<5x256xf32>, vector<64x256xf32> -> vector<64x256xf32>
    %cst_35 = arith.constant 0.000000e+00 : f32
    %52 = vector.broadcast %cst_35 : f32 to vector<64x256xf32>
    %53 = arith.maximumf %51, %52 : vector<64x256xf32>
    %c2_36 = arith.constant 2 : index
    %c0_37 = arith.constant 0 : index
    %c0_38 = arith.constant 0 : index
    %54 = vector.load %arg3[%c2_36, %c0_37, %c0_38] : memref<3x8x64xf32, #tpu.memory_space<vmem>>, vector<1x8x64xf32>
    %55 = vector.shape_cast %54 : vector<1x8x64xf32> to vector<8x64xf32>
    %cst_39 = arith.constant dense<0.000000e+00> : vector<8x256xf32>
    %56 = tpu.matmul %55, %53, %cst_39 {dimension_numbers = #tpu.dot_dimension_numbers<[1], [0], [0], [1], [0, 0, 1, 1], [], []>} : vector<8x64xf32>, vector<64x256xf32>, vector<8x256xf32> -> vector<8x256xf32>
    %c2_40 = arith.constant 2 : index
    %c0_41 = arith.constant 0 : index
    %c0_42 = arith.constant 0 : index
    %57 = vector.load %arg4[%c2_40, %c0_41, %c0_42] : memref<3x8x1xf32, #tpu.memory_space<vmem>>, vector<1x8x1xf32>
    %58 = vector.shape_cast %57 : vector<1x8x1xf32> to vector<8x1xf32>
    %59 = vector.broadcast %58 : vector<8x1xf32> to vector<8x256xf32>
    %60 = arith.addf %56, %59 : vector<8x256xf32>
    %61 = vector.extract_strided_slice %60 {offsets = [0, 0], sizes = [4, 256], strides = [1, 1]} : vector<8x256xf32> to vector<4x256xf32>
    %62 = math.tanh %61 : vector<4x256xf32>
    %63 = vector.extract_strided_slice %60 {offsets = [4, 0], sizes = [4, 256], strides = [1, 1]} : vector<8x256xf32> to vector<4x256xf32>
    %64 = math.exp %62 : vector<4x256xf32>
    %65 = arith.mulf %45, %64 : vector<4x256xf32>
    %66 = arith.addf %65, %63 : vector<4x256xf32>
    %cst_43 = arith.constant dense<0.000000e+00> : vector<256xf32>
    %67 = vector.multi_reduction <add>, %62, %cst_43 [0] : vector<4x256xf32> to vector<256xf32>
    %68 = vector.shape_cast %67 : vector<256xf32> to vector<1x256xf32>
    %69 = arith.addf %48, %68 : vector<1x256xf32>
    %c4_44 = arith.constant 4 : index
    %c0_45 = arith.constant 0 : index
    %70 = vector.load %arg5[%c4_44, %c0_45] : memref<8x256xf32, #tpu.memory_space<vmem>>, vector<4x256xf32>
    tpu.vector_store %arg5[%c4_44, %c0_45], %66 {strides = array<i32>} : memref<8x256xf32, #tpu.memory_space<vmem>>, vector<4x256xf32>,
    %71 = arith.mulf %2, %2 : vector<4x256xf32>
    %cst_46 = arith.constant dense<0.000000e+00> : vector<256xf32>
    %72 = vector.multi_reduction <add>, %71, %cst_46 [0] : vector<4x256xf32> to vector<256xf32>
    %73 = vector.shape_cast %72 : vector<256xf32> to vector<1x256xf32>
    %74 = arith.mulf %66, %66 : vector<4x256xf32>
    %cst_47 = arith.constant dense<0.000000e+00> : vector<256xf32>
    %75 = vector.multi_reduction <add>, %74, %cst_47 [0] : vector<4x256xf32> to vector<256xf32>
    %76 = vector.shape_cast %75 : vector<256xf32> to vector<1x256xf32>
    %77 = arith.addf %73, %76 : vector<1x256xf32>
    %cst_48 = arith.constant -5.000000e-01 : f32
    %78 = vector.broadcast %cst_48 : f32 to vector<1x256xf32>
    %79 = arith.mulf %78, %77 : vector<1x256xf32>
    %cst_49 = arith.constant 7.35150814 : f32
    %80 = vector.broadcast %cst_49 : f32 to vector<1x256xf32>
    %81 = arith.subf %79, %80 : vector<1x256xf32>
    %82 = arith.addf %81, %69 : vector<1x256xf32>
    %c0_50 = arith.constant 0 : index
    %c0_51 = arith.constant 0 : index
    %83 = vector.load %arg6[%c0_50, %c0_51] : memref<1x256xf32, #tpu.memory_space<vmem>>, vector<1x256xf32>
    tpu.vector_store %arg6[%c0_50, %c0_51], %82 {strides = array<i32>} : memref<1x256xf32, #tpu.memory_space<vmem>>, vector<1x256xf32>,
    return
  }
  func.func @transform_0(%arg0: i32) -> (i32, i32) {
    %c0_i32 = arith.constant 0 : i32
    %c0_i32_0 = arith.constant 0 : i32
    return %c0_i32, %arg0 : i32, i32
  }
  func.func @transform_1(%arg0: i32) -> (i32, i32, i32) {
    %c0_i32 = arith.constant 0 : i32
    %c0_i32_0 = arith.constant 0 : i32
    %c0_i32_1 = arith.constant 0 : i32
    %c0_i32_2 = arith.constant 0 : i32
    return %c0_i32, %c0_i32_0, %c0_i32_1 : i32, i32, i32
  }
  func.func @transform_2(%arg0: i32) -> (i32, i32, i32) {
    %c0_i32 = arith.constant 0 : i32
    %c0_i32_0 = arith.constant 0 : i32
    %c0_i32_1 = arith.constant 0 : i32
    %c0_i32_2 = arith.constant 0 : i32
    return %c0_i32, %c0_i32_0, %c0_i32_1 : i32, i32, i32
  }
  func.func @transform_3(%arg0: i32) -> (i32, i32, i32) {
    %c0_i32 = arith.constant 0 : i32
    %c0_i32_0 = arith.constant 0 : i32
    %c0_i32_1 = arith.constant 0 : i32
    %c0_i32_2 = arith.constant 0 : i32
    return %c0_i32, %c0_i32_0, %c0_i32_1 : i32, i32, i32
  }
  func.func @transform_4(%arg0: i32) -> (i32, i32) {
    %c0_i32 = arith.constant 0 : i32
    %c0_i32_0 = arith.constant 0 : i32
    return %c0_i32, %arg0 : i32, i32
  }
  func.func @transform_5(%arg0: i32) -> (i32, i32) {
    %c0_i32 = arith.constant 0 : i32
    %c0_i32_0 = arith.constant 0 : i32
    return %c0_i32, %arg0 : i32, i32
  }
}

</mosaic_0001>

<llo_original>
// kernel: tpu_custom_call.1
$region0: #{tpu_custom_call.1}
  #allocation0 [shape = 'u32[]', space=smem, size = 0x4, offset = 0x4, fixed_abs, tag = 'smem constant byte address 0x4 - core index']
  #allocation1 [shape = 'u32[144,128]{1,0:T(1,128)}', space=vmem, size = 0x12000, scoped, tag = 'internal scratch']
  %s0 = inlined_call_operand.vmem [shape: f32[8,512], index: 0, kind: input, shape index: {}]
  %s1 = inlined_call_operand.vmem [shape: f32[3,64,5], index: 1, kind: input, shape index: {}]
  %s2 = inlined_call_operand.vmem [shape: f32[3,8,64], index: 2, kind: input, shape index: {}]
  %s3 = inlined_call_operand.vmem [shape: f32[3,8,1], index: 3, kind: input, shape index: {}]
  %s4 = inlined_call_operand.hbm [shape: f32[8,512], index: 4, kind: output, shape index: {0}]
  %s5 = inlined_call_operand.hbm [shape: f32[1,512], index: 5, kind: output, shape index: {1}]
  %6 = xla_tuple %s4, %s5
  %s7 = sld [smem:[#allocation0]]
  $region57: #{tpu_custom_call.1} parent=0
    _
  %s9 = ssub.s32 1, %s7
  %s10 = scalar_select 0, %s9, %s7
  $region1: #{tpu_custom_call.1} parent=0
    #allocation2 [shape = 'u8[16384]{0}', space=vmem, size = 0x4000, scoped, tag = 'output window, operand 0']
    #allocation3 [shape = 's32[2]{0}', space=sflag, size = 0x8, scoped, tag = 'scoped memory for tpu_custom_call.1']
    #allocation4 [shape = 'u8[2048]{0}', space=vmem, size = 0x800, scoped, tag = 'output window, operand 1']
    #allocation5 [shape = 's32[2]{0}', space=sflag, size = 0x8, scoped, tag = 'scoped memory for tpu_custom_call.1']
    %11 = vsyncpa [#allocation3], 0
    %s12 = scalar_lea.sflag [#allocation3], 1
    %13 = vsyncpa %s12, 0
    %14 = vsyncpa [#allocation5], 0
    %s15 = scalar_lea.sflag [#allocation5], 1
    %16 = vsyncpa %s15, 0
    loop: start=0, step=1, limit=4
    $region2: #{tpu_custom_call.1} parent=1 // loop_pre_header
      _
    $region3: #{tpu_custom_call.1} parent=1 // loop_header
      %s18 = sphi 0, %s22
      %p19 = scmp.ge.s32.totalorder %s18, 4
      %s28 = sphi 0, %s30
      %s31 = sphi 0, %s28
      %s32 = sphi 0, %s31
      %s48 = sphi 0, %s32
      %s52 = sphi 0, %s52
      %s54 = sphi 0, %s52
      %s55 = sphi 0, %s54
      %s69 = sphi 0, %s55
      %s73 = sphi 0, %s73
      %s75 = sphi 0, %s73
      %s76 = sphi 0, %s75
      %s90 = sphi 0, %s76
      %s94 = sphi 0, %s94
      %s96 = sphi 0, %s94
      %s97 = sphi 0, %s96
      %s111 = sphi 0, %s97
      %s117 = sphi 0, %s119
      %s120 = sphi 0, %s117
      %s121 = sphi 0, %s120
      %s137 = sphi 0, %s121
      %s143 = sphi 0, %s145
      %s146 = sphi 0, %s143
      %s147 = sphi 0, %s146
      %s163 = sphi 0, %s147
    $region4: #{tpu_custom_call.1} parent=1 // loop_header_branch
      %21 = sbr.rel (%p19) target = $region8
    $region5: #{tpu_custom_call.1} parent=1 // loop_body
      %s23 = ssub.s32 %s18, 1
      %s24 = ssub.s32 %s18, 2
      %s25 = sadd.s32 %s18, 1
      %s26 = ssub.s32 %s18, %s25
      %p27 = scmp.eq.s32.totalorder %s26, 0
      %s29 = sadd.s32 %s28, 1
      %s30 = scalar_select %p27, %s28, %s29
      %p33 = pneg %p27
      %p34 = scmp.eq.s32.totalorder %s18, 1
      %p35 = por %p33, %p34
      %p36 = scmp.ne.s32.totalorder %s28, %s31
      %p37 = scmp.eq.s32.totalorder %s18, 0
      %p38 = por %p36, %p37
      %p39 = scmp.ne.s32.totalorder %s28, %s31
      %p40 = scmp.eq.s32.totalorder %s23, 1
      %p41 = por %p39, %p40
      %p42 = scmp.ne.s32.totalorder %s31, %s32
      %p43 = scmp.eq.s32.totalorder %s23, 0
      %p44 = por %p42, %p43
      %p45 = scmp.ne.s32.totalorder %s31, %s32
      %p46 = scmp.eq.s32.totalorder %s24, 1
      %p47 = por %p45, %p46
      %p49 = scmp.ne.s32.totalorder %s32, %s48
      %p50 = scmp.eq.s32.totalorder %s24, 0
      %p51 = por %p49, %p50
      %s53 = sadd.s32 %s52, 1
      %p56 = scmp.eq.s32.totalorder %s18, 1
      %p57 = scmp.ne.s32.totalorder %s52, %s54
      %p58 = scmp.eq.s32.totalorder %s18, 0
      %p59 = por %p57, %p58
      %p60 = scmp.ne.s32.totalorder %s52, %s54
      %p61 = scmp.eq.s32.totalorder %s23, 1
      %p62 = por %p60, %p61
      %p63 = scmp.ne.s32.totalorder %s54, %s55
      %p64 = scmp.eq.s32.totalorder %s23, 0
      %p65 = por %p63, %p64
      %p66 = scmp.ne.s32.totalorder %s54, %s55
      %p67 = scmp.eq.s32.totalorder %s24, 1
      %p68 = por %p66, %p67
      %p70 = scmp.ne.s32.totalorder %s55, %s69
      %p71 = scmp.eq.s32.totalorder %s24, 0
      %p72 = por %p70, %p71
      %s74 = sadd.s32 %s73, 1
      %p77 = scmp.eq.s32.totalorder %s18, 1
      %p78 = scmp.ne.s32.totalorder %s73, %s75
      %p79 = scmp.eq.s32.totalorder %s18, 0
      %p80 = por %p78, %p79
      %p81 = scmp.ne.s32.totalorder %s73, %s75
      %p82 = scmp.eq.s32.totalorder %s23, 1
      %p83 = por %p81, %p82
      %p84 = scmp.ne.s32.totalorder %s75, %s76
      %p85 = scmp.eq.s32.totalorder %s23, 0
      %p86 = por %p84, %p85
      %p87 = scmp.ne.s32.totalorder %s75, %s76
      %p88 = scmp.eq.s32.totalorder %s24, 1
      %p89 = por %p87, %p88
      %p91 = scmp.ne.s32.totalorder %s76, %s90
      %p92 = scmp.eq.s32.totalorder %s24, 0
      %p93 = por %p91, %p92
      %s95 = sadd.s32 %s94, 1
      %p98 = scmp.eq.s32.totalorder %s18, 1
      %p99 = scmp.ne.s32.totalorder %s94, %s96
      %p100 = scmp.eq.s32.totalorder %s18, 0
      %p101 = por %p99, %p100
      %p102 = scmp.ne.s32.totalorder %s94, %s96
      %p103 = scmp.eq.s32.totalorder %s23, 1
      %p104 = por %p102, %p103
      %p105 = scmp.ne.s32.totalorder %s96, %s97
      %p106 = scmp.eq.s32.totalorder %s23, 0
      %p107 = por %p105, %p106
      %p108 = scmp.ne.s32.totalorder %s96, %s97
      %p109 = scmp.eq.s32.totalorder %s24, 1
      %p110 = por %p108, %p109
      %p112 = scmp.ne.s32.totalorder %s97, %s111
      %p113 = scmp.eq.s32.totalorder %s24, 0
      %p114 = por %p112, %p113
      %s115 = ssub.s32 %s18, %s25
      %p116 = scmp.eq.s32.totalorder %s115, 0
      %s118 = sadd.s32 %s117, 1
      %s119 = scalar_select %p116, %s117, %s118
      %p122 = pneg %p116
      %p123 = scmp.eq.s32.totalorder %s18, 1
      %p124 = por %p122, %p123
      %p125 = scmp.ne.s32.totalorder %s117, %s120
      %p126 = scmp.eq.s32.totalorder %s18, 0
      %p127 = por %p125, %p126
      %p128 = scmp.ne.s32.totalorder %s117, %s120
      %p129 = scmp.eq.s32.totalorder %s23, 1
      %p130 = por %p128, %p129
      %p131 = scmp.ne.s32.totalorder %s120, %s121
      %p132 = scmp.eq.s32.totalorder %s23, 0
      %p133 = por %p131, %p132
      %p134 = scmp.ne.s32.totalorder %s120, %s121
      %p135 = scmp.eq.s32.totalorder %s24, 1
      %p136 = por %p134, %p135
      %p138 = scmp.ne.s32.totalorder %s121, %s137
      %p139 = scmp.eq.s32.totalorder %s24, 0
      %p140 = por %p138, %p139
      %s141 = ssub.s32 %s18, %s25
      %p142 = scmp.eq.s32.totalorder %s141, 0
      %s144 = sadd.s32 %s143, 1
      %s145 = scalar_select %p142, %s143, %s144
      %p148 = pneg %p142
      %p149 = scmp.eq.s32.totalorder %s18, 1
      %p150 = por %p148, %p149
      %p151 = scmp.ne.s32.totalorder %s143, %s146
      %p152 = scmp.eq.s32.totalorder %s18, 0
      %p153 = por %p151, %p152
      %p154 = scmp.ne.s32.totalorder %s143, %s146
      %p155 = scmp.eq.s32.totalorder %s23, 1
      %p156 = por %p154, %p155
      %p157 = scmp.ne.s32.totalorder %s146, %s147
      %p158 = scmp.eq.s32.totalorder %s23, 0
      %p159 = por %p157, %p158
      %p160 = scmp.ne.s32.totalorder %s146, %s147
      %p161 = scmp.eq.s32.totalorder %s24, 1
      %p162 = por %p160, %p161
      %p164 = scmp.ne.s32.totalorder %s147, %s163
      %p165 = scmp.eq.s32.totalorder %s24, 0
      %p166 = por %p164, %p165
      %p167 = scmp.le.s32.totalorder 1, %s18
      %p168 = scmp.lt.s32.totalorder %s18, 3
      %p169 = pnand %p167, %p168
      %p170 = pneg %p169
      // Predicated region
      $region9: #{tpu_custom_call.1} parent=5 // pred_check
        _
      $region10: #{tpu_custom_call.1} parent=5 // pred_check_branch
        %172 = sbr.rel (%p169) target = $region12
      $region11: #{tpu_custom_call.1} parent=5 // pred_region
        %s173 = ssub.s32 %s18, 1
        // Predicated region
        $region13: #{tpu_custom_call.1} parent=11 // pred_check
          %p174 = pneg %p65
        $region14: #{tpu_custom_call.1} parent=11 // pred_check_branch
          %176 = sbr.rel (%p174) target = $region16
        $region15: #{tpu_custom_call.1} parent=11 // pred_region
          _
        $region16: #{tpu_custom_call.1} parent=11 // pred_fallthru
          _
        // Predicated region
        $region17: #{tpu_custom_call.1} parent=11 // pred_check
          %p177 = pneg %p86
        $region18: #{tpu_custom_call.1} parent=11 // pred_check_branch
          %179 = sbr.rel (%p177) target = $region20
        $region19: #{tpu_custom_call.1} parent=11 // pred_region
          _
        $region20: #{tpu_custom_call.1} parent=11 // pred_fallthru
          _
        // Predicated region
        $region21: #{tpu_custom_call.1} parent=11 // pred_check
          %p180 = pneg %p107
        $region22: #{tpu_custom_call.1} parent=11 // pred_check_branch
          %182 = sbr.rel (%p180) target = $region24
        $region23: #{tpu_custom_call.1} parent=11 // pred_region
          _
        $region24: #{tpu_custom_call.1} parent=11 // pred_fallthru
          _
      $region12: #{tpu_custom_call.1} parent=5 // pred_fallthru
        _
      %p183 = scmp.lt.s32.totalorder %s18, 2
      // Predicated region
      $region25: #{tpu_custom_call.1} parent=5 // pred_check
        %p184 = pneg %p183
      $region26: #{tpu_custom_call.1} parent=5 // pred_check_branch
        %186 = sbr.rel (%p184) target = $region28
      $region27: #{tpu_custom_call.1} parent=5 // pred_region
        // Predicated region
        $region29: #{tpu_custom_call.1} parent=27 // pred_check
          %p187 = pneg %p38
        $region30: #{tpu_custom_call.1} parent=27 // pred_check_branch
          %189 = sbr.rel (%p187) target = $region32
        $region31: #{tpu_custom_call.1} parent=27 // pred_region
          %s190 = smul.u32 2, %s18
          %p191 = scmp.lt.s32.totalorder %s190, 3
          %s192 = scalar_select %p191, %s190, 3
          %s193 = smul.addr %s192, 8
          %s194 = scalar_lea.vmem %s0, %s193
          %s195 = smul.u32 2, %s18
        $region32: #{tpu_custom_call.1} parent=27 // pred_fallthru
          _
      $region28: #{tpu_custom_call.1} parent=5 // pred_fallthru
        _
      %p196 = scmp.le.s32.totalorder 1, %s18
      %p197 = scmp.lt.s32.totalorder %s18, 3
      %p198 = pnand %p196, %p197
      %p199 = pneg %p198
      // Predicated region
      $region33: #{tpu_custom_call.1} parent=5 // pred_check
        _
      $region34: #{tpu_custom_call.1} parent=5 // pred_check_branch
        %201 = sbr.rel (%p198) target = $region36
      $region35: #{tpu_custom_call.1} parent=5 // pred_region
        %s202 = ssub.s32 %s18, 1
        %s203 = smul.u32 2, %s23
        %p204 = scmp.lt.s32.totalorder %s203, 3
        %s205 = scalar_select %p204, %s203, 3
        %s206 = smul.addr %s205, 8
        %s207 = scalar_lea.vmem %s0, %s206
        %p208 = pneg %p44
        %p209 = pneg %p41
        %p210 = pneg %p65
        %p211 = pneg %p62
        %p212 = pneg %p86
        %p213 = pneg %p83
        %p214 = pneg %p107
        %p215 = pneg %p104
        %p216 = pneg %p133
        %p217 = pneg %p130
        %s218 = sand.u32 %s120, 1
        %s219 = scalar_lea.sflag [#allocation3], %s218
        %s220 = sand.u32 %s120, 1
        %s221 = smul.addr %s220, 16
        %s222 = scalar_lea.vmem [#allocation2], %s221
        %p223 = pneg %p159
        %p224 = pneg %p156
        %s225 = sand.u32 %s146, 1
        %s226 = scalar_lea.sflag [#allocation5], %s225
        %s227 = sand.u32 %s146, 1
        %s228 = smul.addr %s227, 2
        %s229 = scalar_lea.vmem [#allocation4], %s228
        %s230 = smul.u32 2, %s23
        %p231 = scmp.lt.s32.totalorder %s230, 3
        %s232 = scalar_select %p231, %s230, 3
        %s233 = smul.addr %s232, 8
        %s234 = scalar_lea.vmem %s0, %s233
        %s235 = smul.u32 2, %s23
        %s236 = smul.u32 2, %s23
        %s237 = smul.u32 2, %s23
        %v238 = vld [vmem:[%s234] sm:$0xf]
        %v239 = vld [vmem:[%s234 + $0x8] sm:$0xf]
        %240 = vst [vmem:[%s222] sm:$0xf] %v238
        %241 = vst [vmem:[%s222 + $0x8] sm:$0xf] %v239
        %v242 = vld [vmem:[%s234] sm:$0xf]
        %v243 = vld [vmem:[%s234 + $0x8] sm:$0xf]
        %v244 = vld [vmem:[%s234] sm:$0xf0]
        %v245 = vld [vmem:[%s234 + $0x8] sm:$0xf0]
        %vm246 = vcmask 1043456
        %v247 = vsel %vm246, %v242, 1.0
        %v248 = vsel %vm246, %v243, 1.0
        %v249 = vld [vmem:[%s1] sm:$0xff]
        %v250 = vld [vmem:[%s1 + $0x8] sm:$0xff]
        %v251 = vld [vmem:[%s1 + $0x10] sm:$0xff]
        %v252 = vld [vmem:[%s1 + $0x18] sm:$0xff]
        %v253 = vld [vmem:[%s1 + $0x20] sm:$0xff]
        %v254 = vld [vmem:[%s1 + $0x28] sm:$0xff]
        %v255 = vld [vmem:[%s1 + $0x30] sm:$0xff]
        %v256 = vld [vmem:[%s1 + $0x38] sm:$0xff]
        %vm257 = vcmask 39936
        %v259 = vsel %vm257, %v249, 0
        %v262 = vsel %vm257, %v250, 0
        %v265 = vsel %vm257, %v251, 0
        %v268 = vsel %vm257, %v252, 0
        %v271 = vsel %vm257, %v253, 0
        %v274 = vsel %vm257, %v254, 0
        %v277 = vsel %vm257, %v255, 0
        %v280 = vsel %vm257, %v256, 0
        %vm282 = vcmask 1044480
        %v284 = vsel %vm282, %v247, 0
        %v287 = vsel %vm282, %v248, 0
        %289 = vmatprep.subr.mxu0 %v287
        %290 = vmatpush1.msra.mxu0 %v284
        %291 = vmatprep.subr.mxu0 0.0
        %292 = vmatpush1.msra.mxu0 0.0
        %293 = vmatprep.subr.mxu0 0.0
        %294 = vmatpush1.msra.mxu0 0.0
        %295 = vmatprep.subr.mxu0 0.0
        %296 = vmatpush1.msra.mxu0 0.0
        %297 = vmatprep.subr.mxu0 0.0
        %298 = vmatpush1.msra.mxu0 0.0
        %299 = vmatprep.subr.mxu0 0.0
        %300 = vmatpush1.msra.mxu0 0.0
        %301 = vmatprep.subr.mxu0 0.0
        %302 = vmatpush1.msra.mxu0 0.0
        %303 = vmatprep.subr.mxu0 0.0
        %304 = vmatpush1.msra.mxu0 0.0
        %305 = vmatprep.subr.mxu0 0.0
        %306 = vmatpush1.msra.mxu0 0.0
        %307 = vmatprep.subr.mxu0 0.0
        %308 = vmatpush1.msra.mxu0 0.0
        %309 = vmatprep.subr.mxu0 0.0
        %310 = vmatpush1.msra.mxu0 0.0
        %311 = vmatprep.subr.mxu0 0.0
        %312 = vmatpush1.msra.mxu0 0.0
        %313 = vmatprep.subr.mxu0 0.0
        %314 = vmatpush1.msra.mxu0 0.0
        %315 = vmatprep.subr.mxu0 0.0
        %316 = vmatpush1.msra.mxu0 0.0
        %317 = vmatprep.subr.mxu0 0.0
        %318 = vmatpush1.msra.mxu0 0.0
        %319 = vmatprep.subr.mxu0 0.0
        %320 = vmatpush1.msra.mxu0 0.0
        %321 = vmatprep.subr.mxu0 0.0
        %322 = vmatpush1.msra.mxu0 0.0
        %323 = vmatprep.subr.mxu0 0.0
        %324 = vmatpush1.msra.mxu0 0.0
        %325 = vmatprep.subr.mxu0 0.0
        %326 = vmatpush1.msra.mxu0 0.0
        %327 = vmatprep.subr.mxu0 0.0
        %328 = vmatpush1.msra.mxu0 0.0
        %329 = vmatprep.subr.mxu0 0.0
        %330 = vmatpush1.msra.mxu0 0.0
        %331 = vmatprep.subr.mxu0 0.0
        %332 = vmatpush1.msra.mxu0 0.0
        %333 = vmatprep.subr.mxu0 0.0
        %334 = vmatpush1.msra.mxu0 0.0
        %335 = vmatprep.subr.mxu0 0.0
        %336 = vmatpush1.msra.mxu0 0.0
        %337 = vmatprep.subr.mxu0 0.0
        %338 = vmatpush1.msra.mxu0 0.0
        %339 = vmatprep.subr.mxu0 0.0
        %340 = vmatpush1.msra.mxu0 0.0
        %341 = vmatprep.subr.mxu0 0.0
        %342 = vmatpush1.msra.mxu0 0.0
        %343 = vmatprep.subr.mxu0 0.0
        %344 = vmatpush1.msra.mxu0 0.0
        %345 = vmatprep.subr.mxu0 0.0
        %346 = vmatpush1.msra.mxu0 0.0
        %347 = vmatprep.subr.mxu0 0.0
        %348 = vmatpush1.msra.mxu0 0.0
        %349 = vmatprep.subr.mxu0 0.0
        %350 = vmatpush1.msra.mxu0 0.0
        %351 = vmatprep.subr.mxu0 0.0
        %352 = vmatpush1.msra.mxu0 0.0
        %353 = vmatprep.mubr.f32.mxu0 0.0
        %354 = vmatmul.mubr.f32.gmra.mrb[0].mxu0 %v259
        %v355 = vpop.f32.mrb[0].mxu0
        %v356 = vadd.f32 0.0, %v355
        %v357 = vpop.f32.mrb[0].mxu0
        %v358 = vadd.f32 0.0, %v357
        %359 = vmatprep.mubr.f32.mxu0 0.0
        %360 = vmatmul.mubr.f32.gmra.mrb[0].mxu0 %v262
        %v361 = vpop.f32.mrb[0].mxu0
        %v362 = vadd.f32 0.0, %v361
        %v363 = vpop.f32.mrb[0].mxu0
        %v364 = vadd.f32 0.0, %v363
        %365 = vmatprep.mubr.f32.mxu0 0.0
        %366 = vmatmul.mubr.f32.gmra.mrb[0].mxu0 %v265
        %v367 = vpop.f32.mrb[0].mxu0
        %v368 = vadd.f32 0.0, %v367
        %v369 = vpop.f32.mrb[0].mxu0
        %v370 = vadd.f32 0.0, %v369
        %371 = vmatprep.mubr.f32.mxu0 0.0
        %372 = vmatmul.mubr.f32.gmra.mrb[0].mxu0 %v268
        %v373 = vpop.f32.mrb[0].mxu0
        %v374 = vadd.f32 0.0, %v373
        %v375 = vpop.f32.mrb[0].mxu0
        %v376 = vadd.f32 0.0, %v375
        %377 = vmatprep.mubr.f32.mxu0 0.0
        %378 = vmatmul.mubr.f32.gmra.mrb[0].mxu0 %v271
        %v379 = vpop.f32.mrb[0].mxu0
        %v380 = vadd.f32 0.0, %v379
        %v381 = vpop.f32.mrb[0].mxu0
        %v382 = vadd.f32 0.0, %v381
        %383 = vmatprep.mubr.f32.mxu0 0.0
        %384 = vmatmul.mubr.f32.gmra.mrb[0].mxu0 %v274
        %v385 = vpop.f32.mrb[0].mxu0
        %v386 = vadd.f32 0.0, %v385
        %v387 = vpop.f32.mrb[0].mxu0
        %v388 = vadd.f32 0.0, %v387
        %389 = vmatprep.mubr.f32.mxu0 0.0
        %390 = vmatmul.mubr.f32.gmra.mrb[0].mxu0 %v277
        %v391 = vpop.f32.mrb[0].mxu0
        %v392 = vadd.f32 0.0, %v391
        %v393 = vpop.f32.mrb[0].mxu0
        %v394 = vadd.f32 0.0, %v393
        %395 = vmatprep.mubr.f32.mxu0 0.0
        %396 = vmatmul.mubr.f32.gmra.mrb[0].mxu0 %v280
        %v397 = vpop.f32.mrb[0].mxu0
        %v398 = vadd.f32 0.0, %v397
        %v399 = vpop.f32.mrb[0].mxu0
        %v400 = vadd.f32 0.0, %v399
        %401 = vdwg.mxu0
        %v402 = vmax.f32 %v356, 0.0
        %v403 = vmax.f32 %v358, 0.0
        %v404 = vmax.f32 %v362, 0.0
        %v405 = vmax.f32 %v364, 0.0
        %v406 = vmax.f32 %v368, 0.0
        %v407 = vmax.f32 %v370, 0.0
        %v408 = vmax.f32 %v374, 0.0
        %v409 = vmax.f32 %v376, 0.0
        %v410 = vmax.f32 %v380, 0.0
        %v411 = vmax.f32 %v382, 0.0
        %v412 = vmax.f32 %v386, 0.0
        %v413 = vmax.f32 %v388, 0.0
        %v414 = vmax.f32 %v392, 0.0
        %v415 = vmax.f32 %v394, 0.0
        %v416 = vmax.f32 %v398, 0.0
        %v417 = vmax.f32 %v400, 0.0
        %v418 = vld [vmem:[%s2] sm:$0xff]
        %v419 = vld [vmem:[%s3] sm:$0xff]
        %421 = vset.pattern.permute.xlu0 0
        %422 = vperm.xlu0 %421, %v419
        %v423 = vpop.permute.xlu0 %422
        %vm425 = vcmask 523264
        %v427 = vsel %vm425, %v418, 0
        %429 = vmatprep.subr.mxu0 %v403
        %430 = vmatpush1.msra.mxu0 %v402
        %431 = vmatprep.subr.mxu0 %v405
        %432 = vmatpush1.msra.mxu0 %v404
        %433 = vmatprep.subr.mxu0 %v407
        %434 = vmatpush1.msra.mxu0 %v406
        %435 = vmatprep.subr.mxu0 %v409
        %436 = vmatpush1.msra.mxu0 %v408
        %437 = vmatprep.subr.mxu0 %v411
        %438 = vmatpush1.msra.mxu0 %v410
        %439 = vmatprep.subr.mxu0 %v413
        %440 = vmatpush1.msra.mxu0 %v412
        %441 = vmatprep.subr.mxu0 %v415
        %442 = vmatpush1.msra.mxu0 %v414
        %443 = vmatprep.subr.mxu0 %v417
        %444 = vmatpush1.msra.mxu0 %v416
        %445 = vmatprep.subr.mxu0 0.0
        %446 = vmatpush1.msra.mxu0 0.0
        %447 = vmatprep.subr.mxu0 0.0
        %448 = vmatpush1.msra.mxu0 0.0
        %449 = vmatprep.subr.mxu0 0.0
        %450 = vmatpush1.msra.mxu0 0.0
        %451 = vmatprep.subr.mxu0 0.0
        %452 = vmatpush1.msra.mxu0 0.0
        %453 = vmatprep.subr.mxu0 0.0
        %454 = vmatpush1.msra.mxu0 0.0
        %455 = vmatprep.subr.mxu0 0.0
        %456 = vmatpush1.msra.mxu0 0.0
        %457 = vmatprep.subr.mxu0 0.0
        %458 = vmatpush1.msra.mxu0 0.0
        %459 = vmatprep.subr.mxu0 0.0
        %460 = vmatpush1.msra.mxu0 0.0
        %461 = vmatprep.subr.mxu0 0.0
        %462 = vmatpush1.msra.mxu0 0.0
        %463 = vmatprep.subr.mxu0 0.0
        %464 = vmatpush1.msra.mxu0 0.0
        %465 = vmatprep.subr.mxu0 0.0
        %466 = vmatpush1.msra.mxu0 0.0
        %467 = vmatprep.subr.mxu0 0.0
        %468 = vmatpush1.msra.mxu0 0.0
        %469 = vmatprep.subr.mxu0 0.0
        %470 = vmatpush1.msra.mxu0 0.0
        %471 = vmatprep.subr.mxu0 0.0
        %472 = vmatpush1.msra.mxu0 0.0
        %473 = vmatprep.subr.mxu0 0.0
        %474 = vmatpush1.msra.mxu0 0.0
        %475 = vmatprep.subr.mxu0 0.0
        %476 = vmatpush1.msra.mxu0 0.0
        %477 = vmatprep.subr.mxu0 0.0
        %478 = vmatpush1.msra.mxu0 0.0
        %479 = vmatprep.subr.mxu0 0.0
        %480 = vmatpush1.msra.mxu0 0.0
        %481 = vmatprep.subr.mxu0 0.0
        %482 = vmatpush1.msra.mxu0 0.0
        %483 = vmatprep.subr.mxu0 0.0
        %484 = vmatpush1.msra.mxu0 0.0
        %485 = vmatprep.subr.mxu0 0.0
        %486 = vmatpush1.msra.mxu0 0.0
        %487 = vmatprep.subr.mxu0 0.0
        %488 = vmatpush1.msra.mxu0 0.0
        %489 = vmatprep.subr.mxu0 0.0
        %490 = vmatpush1.msra.mxu0 0.0
        %491 = vmatprep.subr.mxu0 0.0
        %492 = vmatpush1.msra.mxu0 0.0
        %493 = vmatprep.mubr.f32.mxu0 0.0
        %494 = vmatmul.mubr.f32.gmra.mrb[0].mxu0 %v427
        %v495 = vpop.f32.mrb[0].mxu0
        %v496 = vadd.f32 %v423, %v495
        %v497 = vpop.f32.mrb[0].mxu0
        %v498 = vadd.f32 %v423, %v497
        %499 = vdwg.mxu0
        %v500 = vtanh.pop %v496
        %v501 = vtanh.pop %v498
        %v502 = vmul.f32 %v500, 1.442695
        %v503 = vpow.pop %v502
        %v504 = vmul.f32 %v501, 1.442695
        %v505 = vpow.pop %v504
        %v508 = vrot.slane %v503, 4
        %v509 = vrot.slane %v505, 4
        %v512 = vmul.f32 %v244, %v508
        %v513 = vmul.f32 %v245, %v509
        %v514 = vadd.f32 %v512, %v496
        %v515 = vadd.f32 %v513, %v498
        %v516 = vsel %vm246, %v500, 0.0
        %v517 = vrot.slane %v516, 4
        %v518 = vadd.f32 %v516, %v517
        %v519 = vrot.slane %v518, 2
        %v520 = vadd.f32 %v518, %v519
        %v521 = vrot.slane %v520, 1
        %v522 = vadd.f32 %v520, %v521
        %v523 = vsel %vm246, %v501, 0.0
        %v524 = vrot.slane %v523, 4
        %v525 = vadd.f32 %v523, %v524
        %v526 = vrot.slane %v525, 2
        %v527 = vadd.f32 %v525, %v526
        %v528 = vrot.slane %v527, 1
        %v529 = vadd.f32 %v527, %v528
        %v530 = vadd.f32 %v522, 0.0
        %v531 = vadd.f32 %v529, 0.0
        %s532 = scalar_lea.vmem %s1, 64
        %v533 = vld [vmem:[%s532] sm:$0xff]
        %v534 = vld [vmem:[%s532 + $0x8] sm:$0xff]
        %v535 = vld [vmem:[%s532 + $0x10] sm:$0xff]
        %v536 = vld [vmem:[%s532 + $0x18] sm:$0xff]
        %v537 = vld [vmem:[%s532 + $0x20] sm:$0xff]
        %v538 = vld [vmem:[%s532 + $0x28] sm:$0xff]
        %v539 = vld [vmem:[%s532 + $0x30] sm:$0xff]
        %v540 = vld [vmem:[%s532 + $0x38] sm:$0xff]
        %v542 = vsel %vm257, %v533, 0
        %v545 = vsel %vm257, %v534, 0
        %v548 = vsel %vm257, %v535, 0
        %v551 = vsel %vm257, %v536, 0
        %v554 = vsel %vm257, %v537, 0
        %v557 = vsel %vm257, %v538, 0
        %v560 = vsel %vm257, %v539, 0
        %v563 = vsel %vm257, %v540, 0
        %565 = vmatprep.subr.mxu0 %v287
        %566 = vmatpush1.msra.mxu0 %v284
        %567 = vmatprep.subr.mxu0 0.0
        %568 = vmatpush1.msra.mxu0 0.0
        %569 = vmatprep.subr.mxu0 0.0
        %570 = vmatpush1.msra.mxu0 0.0
        %571 = vmatprep.subr.mxu0 0.0
        %572 = vmatpush1.msra.mxu0 0.0
        %573 = vmatprep.subr.mxu0 0.0
        %574 = vmatpush1.msra.mxu0 0.0
        %575 = vmatprep.subr.mxu0 0.0
        %576 = vmatpush1.msra.mxu0 0.0
        %577 = vmatprep.subr.mxu0 0.0
        %578 = vmatpush1.msra.mxu0 0.0
        %579 = vmatprep.subr.mxu0 0.0
        %580 = vmatpush1.msra.mxu0 0.0
        %581 = vmatprep.subr.mxu0 0.0
        %582 = vmatpush1.msra.mxu0 0.0
        %583 = vmatprep.subr.mxu0 0.0
        %584 = vmatpush1.msra.mxu0 0.0
        %585 = vmatprep.subr.mxu0 0.0
        %586 = vmatpush1.msra.mxu0 0.0
        %587 = vmatprep.subr.mxu0 0.0
        %588 = vmatpush1.msra.mxu0 0.0
        %589 = vmatprep.subr.mxu0 0.0
        %590 = vmatpush1.msra.mxu0 0.0
        %591 = vmatprep.subr.mxu0 0.0
        %592 = vmatpush1.msra.mxu0 0.0
        %593 = vmatprep.subr.mxu0 0.0
        %594 = vmatpush1.msra.mxu0 0.0
        %595 = vmatprep.subr.mxu0 0.0
        %596 = vmatpush1.msra.mxu0 0.0
        %597 = vmatprep.subr.mxu0 0.0
        %598 = vmatpush1.msra.mxu0 0.0
        %599 = vmatprep.subr.mxu0 0.0
        %600 = vmatpush1.msra.mxu0 0.0
        %601 = vmatprep.subr.mxu0 0.0
        %602 = vmatpush1.msra.mxu0 0.0
        %603 = vmatprep.subr.mxu0 0.0
        %604 = vmatpush1.msra.mxu0 0.0
        %605 = vmatprep.subr.mxu0 0.0
        %606 = vmatpush1.msra.mxu0 0.0
        %607 = vmatprep.subr.mxu0 0.0
        %608 = vmatpush1.msra.mxu0 0.0
        %609 = vmatprep.subr.mxu0 0.0
        %610 = vmatpush1.msra.mxu0 0.0
        %611 = vmatprep.subr.mxu0 0.0
        %612 = vmatpush1.msra.mxu0 0.0
        %613 = vmatprep.subr.mxu0 0.0
        %614 = vmatpush1.msra.mxu0 0.0
        %615 = vmatprep.subr.mxu0 0.0
        %616 = vmatpush1.msra.mxu0 0.0
        %617 = vmatprep.subr.mxu0 0.0
        %618 = vmatpush1.msra.mxu0 0.0
        %619 = vmatprep.subr.mxu0 0.0
        %620 = vmatpush1.msra.mxu0 0.0
        %621 = vmatprep.subr.mxu0 0.0
        %622 = vmatpush1.msra.mxu0 0.0
        %623 = vmatprep.subr.mxu0 0.0
        %624 = vmatpush1.msra.mxu0 0.0
        %625 = vmatprep.subr.mxu0 0.0
        %626 = vmatpush1.msra.mxu0 0.0
        %627 = vmatprep.subr.mxu0 0.0
        %628 = vmatpush1.msra.mxu0 0.0
        %629 = vmatprep.mubr.f32.mxu0 0.0
        %630 = vmatmul.mubr.f32.gmra.mrb[0].mxu0 %v542
        %v631 = vpop.f32.mrb[0].mxu0
        %v632 = vadd.f32 0.0, %v631
        %v633 = vpop.f32.mrb[0].mxu0
        %v634 = vadd.f32 0.0, %v633
        %635 = vmatprep.mubr.f32.mxu0 0.0
        %636 = vmatmul.mubr.f32.gmra.mrb[0].mxu0 %v545
        %v637 = vpop.f32.mrb[0].mxu0
        %v638 = vadd.f32 0.0, %v637
        %v639 = vpop.f32.mrb[0].mxu0
        %v640 = vadd.f32 0.0, %v639
        %641 = vmatprep.mubr.f32.mxu0 0.0
        %642 = vmatmul.mubr.f32.gmra.mrb[0].mxu0 %v548
        %v643 = vpop.f32.mrb[0].mxu0
        %v644 = vadd.f32 0.0, %v643
        %v645 = vpop.f32.mrb[0].mxu0
        %v646 = vadd.f32 0.0, %v645
        %647 = vmatprep.mubr.f32.mxu0 0.0
        %648 = vmatmul.mubr.f32.gmra.mrb[0].mxu0 %v551
        %v649 = vpop.f32.mrb[0].mxu0
        %v650 = vadd.f32 0.0, %v649
        %v651 = vpop.f32.mrb[0].mxu0
        %v652 = vadd.f32 0.0, %v651
        %653 = vmatprep.mubr.f32.mxu0 0.0
        %654 = vmatmul.mubr.f32.gmra.mrb[0].mxu0 %v554
        %v655 = vpop.f32.mrb[0].mxu0
        %v656 = vadd.f32 0.0, %v655
        %v657 = vpop.f32.mrb[0].mxu0
        %v658 = vadd.f32 0.0, %v657
        %659 = vmatprep.mubr.f32.mxu0 0.0
        %660 = vmatmul.mubr.f32.gmra.mrb[0].mxu0 %v557
        %v661 = vpop.f32.mrb[0].mxu0
        %v662 = vadd.f32 0.0, %v661
        %v663 = vpop.f32.mrb[0].mxu0
        %v664 = vadd.f32 0.0, %v663
        %665 = vmatprep.mubr.f32.mxu0 0.0
        %666 = vmatmul.mubr.f32.gmra.mrb[0].mxu0 %v560
        %v667 = vpop.f32.mrb[0].mxu0
        %v668 = vadd.f32 0.0, %v667
        %v669 = vpop.f32.mrb[0].mxu0
        %v670 = vadd.f32 0.0, %v669
        %671 = vmatprep.mubr.f32.mxu0 0.0
        %672 = vmatmul.mubr.f32.gmra.mrb[0].mxu0 %v563
        %v673 = vpop.f32.mrb[0].mxu0
        %v674 = vadd.f32 0.0, %v673
        %v675 = vpop.f32.mrb[0].mxu0
        %v676 = vadd.f32 0.0, %v675
        %677 = vdwg.mxu0
        %v678 = vmax.f32 %v632, 0.0
        %v679 = vmax.f32 %v634, 0.0
        %v680 = vmax.f32 %v638, 0.0
        %v681 = vmax.f32 %v640, 0.0
        %v682 = vmax.f32 %v644, 0.0
        %v683 = vmax.f32 %v646, 0.0
        %v684 = vmax.f32 %v650, 0.0
        %v685 = vmax.f32 %v652, 0.0
        %v686 = vmax.f32 %v656, 0.0
        %v687 = vmax.f32 %v658, 0.0
        %v688 = vmax.f32 %v662, 0.0
        %v689 = vmax.f32 %v664, 0.0
        %v690 = vmax.f32 %v668, 0.0
        %v691 = vmax.f32 %v670, 0.0
        %v692 = vmax.f32 %v674, 0.0
        %v693 = vmax.f32 %v676, 0.0
        %s694 = scalar_lea.vmem %s2, 8
        %v695 = vld [vmem:[%s694] sm:$0xff]
        %s696 = scalar_lea.vmem %s3, 8
        %v697 = vld [vmem:[%s696] sm:$0xff]
        %699 = vset.pattern.permute.xlu0 0
        %700 = vperm.xlu0 %699, %v697
        %v701 = vpop.permute.xlu0 %700
        %v704 = vsel %vm425, %v695, 0
        %706 = vmatprep.subr.mxu0 %v679
        %707 = vmatpush1.msra.mxu0 %v678
        %708 = vmatprep.subr.mxu0 %v681
        %709 = vmatpush1.msra.mxu0 %v680
        %710 = vmatprep.subr.mxu0 %v683
        %711 = vmatpush1.msra.mxu0 %v682
        %712 = vmatprep.subr.mxu0 %v685
        %713 = vmatpush1.msra.mxu0 %v684
        %714 = vmatprep.subr.mxu0 %v687
        %715 = vmatpush1.msra.mxu0 %v686
        %716 = vmatprep.subr.mxu0 %v689
        %717 = vmatpush1.msra.mxu0 %v688
        %718 = vmatprep.subr.mxu0 %v691
        %719 = vmatpush1.msra.mxu0 %v690
        %720 = vmatprep.subr.mxu0 %v693
        %721 = vmatpush1.msra.mxu0 %v692
        %722 = vmatprep.subr.mxu0 0.0
        %723 = vmatpush1.msra.mxu0 0.0
        %724 = vmatprep.subr.mxu0 0.0
        %725 = vmatpush1.msra.mxu0 0.0
        %726 = vmatprep.subr.mxu0 0.0
        %727 = vmatpush1.msra.mxu0 0.0
        %728 = vmatprep.subr.mxu0 0.0
        %729 = vmatpush1.msra.mxu0 0.0
        %730 = vmatprep.subr.mxu0 0.0
        %731 = vmatpush1.msra.mxu0 0.0
        %732 = vmatprep.subr.mxu0 0.0
        %733 = vmatpush1.msra.mxu0 0.0
        %734 = vmatprep.subr.mxu0 0.0
        %735 = vmatpush1.msra.mxu0 0.0
        %736 = vmatprep.subr.mxu0 0.0
        %737 = vmatpush1.msra.mxu0 0.0
        %738 = vmatprep.subr.mxu0 0.0
        %739 = vmatpush1.msra.mxu0 0.0
        %740 = vmatprep.subr.mxu0 0.0
        %741 = vmatpush1.msra.mxu0 0.0
        %742 = vmatprep.subr.mxu0 0.0
        %743 = vmatpush1.msra.mxu0 0.0
        %744 = vmatprep.subr.mxu0 0.0
        %745 = vmatpush1.msra.mxu0 0.0
        %746 = vmatprep.subr.mxu0 0.0
        %747 = vmatpush1.msra.mxu0 0.0
        %748 = vmatprep.subr.mxu0 0.0
        %749 = vmatpush1.msra.mxu0 0.0
        %750 = vmatprep.subr.mxu0 0.0
        %751 = vmatpush1.msra.mxu0 0.0
        %752 = vmatprep.subr.mxu0 0.0
        %753 = vmatpush1.msra.mxu0 0.0
        %754 = vmatprep.subr.mxu0 0.0
        %755 = vmatpush1.msra.mxu0 0.0
        %756 = vmatprep.subr.mxu0 0.0
        %757 = vmatpush1.msra.mxu0 0.0
        %758 = vmatprep.subr.mxu0 0.0
        %759 = vmatpush1.msra.mxu0 0.0
        %760 = vmatprep.subr.mxu0 0.0
        %761 = vmatpush1.msra.mxu0 0.0
        %762 = vmatprep.subr.mxu0 0.0
        %763 = vmatpush1.msra.mxu0 0.0
        %764 = vmatprep.subr.mxu0 0.0
        %765 = vmatpush1.msra.mxu0 0.0
        %766 = vmatprep.subr.mxu0 0.0
        %767 = vmatpush1.msra.mxu0 0.0
        %768 = vmatprep.subr.mxu0 0.0
        %769 = vmatpush1.msra.mxu0 0.0
        %770 = vmatprep.mubr.f32.mxu0 0.0
        %771 = vmatmul.mubr.f32.gmra.mrb[0].mxu0 %v704
        %v772 = vpop.f32.mrb[0].mxu0
        %v773 = vadd.f32 %v701, %v772
        %v774 = vpop.f32.mrb[0].mxu0
        %v775 = vadd.f32 %v701, %v774
        %776 = vdwg.mxu0
        %v777 = vtanh.pop %v773
        %v778 = vtanh.pop %v775
        %v779 = vmul.f32 %v777, 1.442695
        %v780 = vpow.pop %v779
        %v781 = vmul.f32 %v778, 1.442695
        %v782 = vpow.pop %v781
        %v785 = vrot.slane %v780, 4
        %v786 = vrot.slane %v782, 4
        %v789 = vmul.f32 %v514, %v785
        %v790 = vmul.f32 %v515, %v786
        %v791 = vadd.f32 %v789, %v773
        %v792 = vadd.f32 %v790, %v775
        %v793 = vsel %vm246, %v777, 0.0
        %v794 = vrot.slane %v793, 4
        %v795 = vadd.f32 %v793, %v794
        %v796 = vrot.slane %v795, 2
        %v797 = vadd.f32 %v795, %v796
        %v798 = vrot.slane %v797, 1
        %v799 = vadd.f32 %v797, %v798
        %v800 = vsel %vm246, %v778, 0.0
        %v801 = vrot.slane %v800, 4
        %v802 = vadd.f32 %v800, %v801
        %v803 = vrot.slane %v802, 2
        %v804 = vadd.f32 %v802, %v803
        %v805 = vrot.slane %v804, 1
        %v806 = vadd.f32 %v804, %v805
        %v807 = vadd.f32 %v530, %v799
        %v808 = vadd.f32 %v531, %v806
        %s809 = scalar_lea.vmem %s1, 128
        %v810 = vld [vmem:[%s809] sm:$0xff]
        %v811 = vld [vmem:[%s809 + $0x8] sm:$0xff]
        %v812 = vld [vmem:[%s809 + $0x10] sm:$0xff]
        %v813 = vld [vmem:[%s809 + $0x18] sm:$0xff]
        %v814 = vld [vmem:[%s809 + $0x20] sm:$0xff]
        %v815 = vld [vmem:[%s809 + $0x28] sm:$0xff]
        %v816 = vld [vmem:[%s809 + $0x30] sm:$0xff]
        %v817 = vld [vmem:[%s809 + $0x38] sm:$0xff]
        %v819 = vsel %vm257, %v810, 0
        %v822 = vsel %vm257, %v811, 0
        %v825 = vsel %vm257, %v812, 0
        %v828 = vsel %vm257, %v813, 0
        %v831 = vsel %vm257, %v814, 0
        %v834 = vsel %vm257, %v815, 0
        %v837 = vsel %vm257, %v816, 0
        %v840 = vsel %vm257, %v817, 0
        %842 = vmatprep.subr.mxu0 %v287
        %843 = vmatpush1.msra.mxu0 %v284
        %844 = vmatprep.subr.mxu0 0.0
        %845 = vmatpush1.msra.mxu0 0.0
        %846 = vmatprep.subr.mxu0 0.0
        %847 = vmatpush1.msra.mxu0 0.0
        %848 = vmatprep.subr.mxu0 0.0
        %849 = vmatpush1.msra.mxu0 0.0
        %850 = vmatprep.subr.mxu0 0.0
        %851 = vmatpush1.msra.mxu0 0.0
        %852 = vmatprep.subr.mxu0 0.0
        %853 = vmatpush1.msra.mxu0 0.0
        %854 = vmatprep.subr.mxu0 0.0
        %855 = vmatpush1.msra.mxu0 0.0
        %856 = vmatprep.subr.mxu0 0.0
        %857 = vmatpush1.msra.mxu0 0.0
        %858 = vmatprep.subr.mxu0 0.0
        %859 = vmatpush1.msra.mxu0 0.0
        %860 = vmatprep.subr.mxu0 0.0
        %861 = vmatpush1.msra.mxu0 0.0
        %862 = vmatprep.subr.mxu0 0.0
        %863 = vmatpush1.msra.mxu0 0.0
        %864 = vmatprep.subr.mxu0 0.0
        %865 = vmatpush1.msra.mxu0 0.0
        %866 = vmatprep.subr.mxu0 0.0
        %867 = vmatpush1.msra.mxu0 0.0
        %868 = vmatprep.subr.mxu0 0.0
        %869 = vmatpush1.msra.mxu0 0.0
        %870 = vmatprep.subr.mxu0 0.0
        %871 = vmatpush1.msra.mxu0 0.0
        %872 = vmatprep.subr.mxu0 0.0
        %873 = vmatpush1.msra.mxu0 0.0
        %874 = vmatprep.subr.mxu0 0.0
        %875 = vmatpush1.msra.mxu0 0.0
        %876 = vmatprep.subr.mxu0 0.0
        %877 = vmatpush1.msra.mxu0 0.0
        %878 = vmatprep.subr.mxu0 0.0
        %879 = vmatpush1.msra.mxu0 0.0
        %880 = vmatprep.subr.mxu0 0.0
        %881 = vmatpush1.msra.mxu0 0.0
        %882 = vmatprep.subr.mxu0 0.0
        %883 = vmatpush1.msra.mxu0 0.0
        %884 = vmatprep.subr.mxu0 0.0
        %885 = vmatpush1.msra.mxu0 0.0
        %886 = vmatprep.subr.mxu0 0.0
        %887 = vmatpush1.msra.mxu0 0.0
        %888 = vmatprep.subr.mxu0 0.0
        %889 = vmatpush1.msra.mxu0 0.0
        %890 = vmatprep.subr.mxu0 0.0
        %891 = vmatpush1.msra.mxu0 0.0
        %892 = vmatprep.subr.mxu0 0.0
        %893 = vmatpush1.msra.mxu0 0.0
        %894 = vmatprep.subr.mxu0 0.0
        %895 = vmatpush1.msra.mxu0 0.0
        %896 = vmatprep.subr.mxu0 0.0
        %897 = vmatpush1.msra.mxu0 0.0
        %898 = vmatprep.subr.mxu0 0.0
        %899 = vmatpush1.msra.mxu0 0.0
        %900 = vmatprep.subr.mxu0 0.0
        %901 = vmatpush1.msra.mxu0 0.0
        %902 = vmatprep.subr.mxu0 0.0
        %903 = vmatpush1.msra.mxu0 0.0
        %904 = vmatprep.subr.mxu0 0.0
        %905 = vmatpush1.msra.mxu0 0.0
        %906 = vmatprep.mubr.f32.mxu0 0.0
        %907 = vmatmul.mubr.f32.gmra.mrb[0].mxu0 %v819
        %v908 = vpop.f32.mrb[0].mxu0
        %v909 = vadd.f32 0.0, %v908
        %v910 = vpop.f32.mrb[0].mxu0
        %v911 = vadd.f32 0.0, %v910
        %912 = vmatprep.mubr.f32.mxu0 0.0
        %913 = vmatmul.mubr.f32.gmra.mrb[0].mxu0 %v822
        %v914 = vpop.f32.mrb[0].mxu0
        %v915 = vadd.f32 0.0, %v914
        %v916 = vpop.f32.mrb[0].mxu0
        %v917 = vadd.f32 0.0, %v916
        %918 = vmatprep.mubr.f32.mxu0 0.0
        %919 = vmatmul.mubr.f32.gmra.mrb[0].mxu0 %v825
        %v920 = vpop.f32.mrb[0].mxu0
        %v921 = vadd.f32 0.0, %v920
        %v922 = vpop.f32.mrb[0].mxu0
        %v923 = vadd.f32 0.0, %v922
        %924 = vmatprep.mubr.f32.mxu0 0.0
        %925 = vmatmul.mubr.f32.gmra.mrb[0].mxu0 %v828
        %v926 = vpop.f32.mrb[0].mxu0
        %v927 = vadd.f32 0.0, %v926
        %v928 = vpop.f32.mrb[0].mxu0
        %v929 = vadd.f32 0.0, %v928
        %930 = vmatprep.mubr.f32.mxu0 0.0
        %931 = vmatmul.mubr.f32.gmra.mrb[0].mxu0 %v831
        %v932 = vpop.f32.mrb[0].mxu0
        %v933 = vadd.f32 0.0, %v932
        %v934 = vpop.f32.mrb[0].mxu0
        %v935 = vadd.f32 0.0, %v934
        %936 = vmatprep.mubr.f32.mxu0 0.0
        %937 = vmatmul.mubr.f32.gmra.mrb[0].mxu0 %v834
        %v938 = vpop.f32.mrb[0].mxu0
        %v939 = vadd.f32 0.0, %v938
        %v940 = vpop.f32.mrb[0].mxu0
        %v941 = vadd.f32 0.0, %v940
        %942 = vmatprep.mubr.f32.mxu0 0.0
        %943 = vmatmul.mubr.f32.gmra.mrb[0].mxu0 %v837
        %v944 = vpop.f32.mrb[0].mxu0
        %v945 = vadd.f32 0.0, %v944
        %v946 = vpop.f32.mrb[0].mxu0
        %v947 = vadd.f32 0.0, %v946
        %948 = vmatprep.mubr.f32.mxu0 0.0
        %949 = vmatmul.mubr.f32.gmra.mrb[0].mxu0 %v840
        %v950 = vpop.f32.mrb[0].mxu0
        %v951 = vadd.f32 0.0, %v950
        %v952 = vpop.f32.mrb[0].mxu0
        %v953 = vadd.f32 0.0, %v952
        %954 = vdwg.mxu0
        %v955 = vmax.f32 %v909, 0.0
        %v956 = vmax.f32 %v911, 0.0
        %v957 = vmax.f32 %v915, 0.0
        %v958 = vmax.f32 %v917, 0.0
        %v959 = vmax.f32 %v921, 0.0
        %v960 = vmax.f32 %v923, 0.0
        %v961 = vmax.f32 %v927, 0.0
        %v962 = vmax.f32 %v929, 0.0
        %v963 = vmax.f32 %v933, 0.0
        %v964 = vmax.f32 %v935, 0.0
        %v965 = vmax.f32 %v939, 0.0
        %v966 = vmax.f32 %v941, 0.0
        %v967 = vmax.f32 %v945, 0.0
        %v968 = vmax.f32 %v947, 0.0
        %v969 = vmax.f32 %v951, 0.0
        %v970 = vmax.f32 %v953, 0.0
        %s971 = scalar_lea.vmem %s2, 16
        %v972 = vld [vmem:[%s971] sm:$0xff]
        %s973 = scalar_lea.vmem %s3, 16
        %v974 = vld [vmem:[%s973] sm:$0xff]
        %976 = vset.pattern.permute.xlu0 0
        %977 = vperm.xlu0 %976, %v974
        %v978 = vpop.permute.xlu0 %977
        %v981 = vsel %vm425, %v972, 0
        %983 = vmatprep.subr.mxu0 %v956
        %984 = vmatpush1.msra.mxu0 %v955
        %985 = vmatprep.subr.mxu0 %v958
        %986 = vmatpush1.msra.mxu0 %v957
        %987 = vmatprep.subr.mxu0 %v960
        %988 = vmatpush1.msra.mxu0 %v959
        %989 = vmatprep.subr.mxu0 %v962
        %990 = vmatpush1.msra.mxu0 %v961
        %991 = vmatprep.subr.mxu0 %v964
        %992 = vmatpush1.msra.mxu0 %v963
        %993 = vmatprep.subr.mxu0 %v966
        %994 = vmatpush1.msra.mxu0 %v965
        %995 = vmatprep.subr.mxu0 %v968
        %996 = vmatpush1.msra.mxu0 %v967
        %997 = vmatprep.subr.mxu0 %v970
        %998 = vmatpush1.msra.mxu0 %v969
        %999 = vmatprep.subr.mxu0 0.0
        %1000 = vmatpush1.msra.mxu0 0.0
        %1001 = vmatprep.subr.mxu0 0.0
        %1002 = vmatpush1.msra.mxu0 0.0
        %1003 = vmatprep.subr.mxu0 0.0
        %1004 = vmatpush1.msra.mxu0 0.0
        %1005 = vmatprep.subr.mxu0 0.0
        %1006 = vmatpush1.msra.mxu0 0.0
        %1007 = vmatprep.subr.mxu0 0.0
        %1008 = vmatpush1.msra.mxu0 0.0
        %1009 = vmatprep.subr.mxu0 0.0
        %1010 = vmatpush1.msra.mxu0 0.0
        %1011 = vmatprep.subr.mxu0 0.0
        %1012 = vmatpush1.msra.mxu0 0.0
        %1013 = vmatprep.subr.mxu0 0.0
        %1014 = vmatpush1.msra.mxu0 0.0
        %1015 = vmatprep.subr.mxu0 0.0
        %1016 = vmatpush1.msra.mxu0 0.0
        %1017 = vmatprep.subr.mxu0 0.0
        %1018 = vmatpush1.msra.mxu0 0.0
        %1019 = vmatprep.subr.mxu0 0.0
        %1020 = vmatpush1.msra.mxu0 0.0
        %1021 = vmatprep.subr.mxu0 0.0
        %1022 = vmatpush1.msra.mxu0 0.0
        %1023 = vmatprep.subr.mxu0 0.0
        %1024 = vmatpush1.msra.mxu0 0.0
        %1025 = vmatprep.subr.mxu0 0.0
        %1026 = vmatpush1.msra.mxu0 0.0
        %1027 = vmatprep.subr.mxu0 0.0
        %1028 = vmatpush1.msra.mxu0 0.0
        %1029 = vmatprep.subr.mxu0 0.0
        %1030 = vmatpush1.msra.mxu0 0.0
        %1031 = vmatprep.subr.mxu0 0.0
        %1032 = vmatpush1.msra.mxu0 0.0
        %1033 = vmatprep.subr.mxu0 0.0
        %1034 = vmatpush1.msra.mxu0 0.0
        %1035 = vmatprep.subr.mxu0 0.0
        %1036 = vmatpush1.msra.mxu0 0.0
        %1037 = vmatprep.subr.mxu0 0.0
        %1038 = vmatpush1.msra.mxu0 0.0
        %1039 = vmatprep.subr.mxu0 0.0
        %1040 = vmatpush1.msra.mxu0 0.0
        %1041 = vmatprep.subr.mxu0 0.0
        %1042 = vmatpush1.msra.mxu0 0.0
        %1043 = vmatprep.subr.mxu0 0.0
        %1044 = vmatpush1.msra.mxu0 0.0
        %1045 = vmatprep.subr.mxu0 0.0
        %1046 = vmatpush1.msra.mxu0 0.0
        %1047 = vmatprep.mubr.f32.mxu0 0.0
        %1048 = vmatmul.mubr.f32.gmra.mrb[0].mxu0 %v981
        %v1049 = vpop.f32.mrb[0].mxu0
        %v1050 = vadd.f32 %v978, %v1049
        %v1051 = vpop.f32.mrb[0].mxu0
        %v1052 = vadd.f32 %v978, %v1051
        %1053 = vdwg.mxu0
        %v1054 = vtanh.pop %v1050
        %v1055 = vtanh.pop %v1052
        %v1056 = vmul.f32 %v1054, 1.442695
        %v1057 = vpow.pop %v1056
        %v1058 = vmul.f32 %v1055, 1.442695
        %v1059 = vpow.pop %v1058
        %v1062 = vrot.slane %v1057, 4
        %v1063 = vrot.slane %v1059, 4
        %v1066 = vmul.f32 %v791, %v1062
        %v1067 = vmul.f32 %v792, %v1063
        %v1068 = vadd.f32 %v1066, %v1050
        %v1069 = vadd.f32 %v1067, %v1052
        %v1070 = vsel %vm246, %v1054, 0.0
        %v1071 = vrot.slane %v1070, 4
        %v1072 = vadd.f32 %v1070, %v1071
        %v1073 = vrot.slane %v1072, 2
        %v1074 = vadd.f32 %v1072, %v1073
        %v1075 = vrot.slane %v1074, 1
        %v1076 = vadd.f32 %v1074, %v1075
        %v1077 = vsel %vm246, %v1055, 0.0
        %v1078 = vrot.slane %v1077, 4
        %v1079 = vadd.f32 %v1077, %v1078
        %v1080 = vrot.slane %v1079, 2
        %v1081 = vadd.f32 %v1079, %v1080
        %v1082 = vrot.slane %v1081, 1
        %v1083 = vadd.f32 %v1081, %v1082
        %v1084 = vadd.f32 %v807, %v1076
        %v1085 = vadd.f32 %v808, %v1083
        %1086 = vst [vmem:[%s222] sm:$0xf0] %v1068
        %1087 = vst [vmem:[%s222 + $0x8] sm:$0xf0] %v1069
        %v1088 = vmul.f32 %v242, %v242
        %v1089 = vmul.f32 %v243, %v243
        %v1090 = vsel %vm246, %v1088, 0.0
        %v1091 = vrot.slane %v1090, 4
        %v1092 = vadd.f32 %v1090, %v1091
        %v1093 = vrot.slane %v1092, 2
        %v1094 = vadd.f32 %v1092, %v1093
        %v1095 = vrot.slane %v1094, 1
        %v1096 = vadd.f32 %v1094, %v1095
        %v1097 = vsel %vm246, %v1089, 0.0
        %v1098 = vrot.slane %v1097, 4
        %v1099 = vadd.f32 %v1097, %v1098
        %v1100 = vrot.slane %v1099, 2
        %v1101 = vadd.f32 %v1099, %v1100
        %v1102 = vrot.slane %v1101, 1
        %v1103 = vadd.f32 %v1101, %v1102
        %v1104 = vmul.f32 %v1068, %v1068
        %v1105 = vmul.f32 %v1069, %v1069
        %v1108 = vrot.slane %v1104, 4
        %v1109 = vrot.slane %v1105, 4
        %v1112 = vsel %vm246, %v1108, 0.0
        %v1113 = vrot.slane %v1112, 4
        %v1114 = vadd.f32 %v1112, %v1113
        %v1115 = vrot.slane %v1114, 2
        %v1116 = vadd.f32 %v1114, %v1115
        %v1117 = vrot.slane %v1116, 1
        %v1118 = vadd.f32 %v1116, %v1117
        %v1119 = vsel %vm246, %v1109, 0.0
        %v1120 = vrot.slane %v1119, 4
        %v1121 = vadd.f32 %v1119, %v1120
        %v1122 = vrot.slane %v1121, 2
        %v1123 = vadd.f32 %v1121, %v1122
        %v1124 = vrot.slane %v1123, 1
        %v1125 = vadd.f32 %v1123, %v1124
        %v1126 = vadd.f32 %v1096, %v1118
        %v1127 = vadd.f32 %v1103, %v1125
        %v1128 = vmul.f32 %v1126, -0.5
        %v1129 = vmul.f32 %v1127, -0.5
        %v1130 = vsub.f32 %v1128, 7.351508
        %v1131 = vsub.f32 %v1129, 7.351508
        %v1132 = vadd.f32 %v1130, %v1084
        %v1133 = vadd.f32 %v1131, %v1085
        %v1136 = vcombine.low %v1132, %v1133
        %v1138 = vunpack.c.l.s4 1966171168
        %v1139 = vunpack.c.0.s8 %v1138
        %v1140 = vlaneseq
        %v1141 = vshrl.u32 %v1140, 7
        %v1142 = vsub.s32 %v1139, %v1141
        %v1143 = vrot.slane %v1136, %v1142
        %v1145 = vunpack.c.l.s4 1966171168
        %v1146 = vunpack.c.0.s8 %v1145
        %v1147 = vlaneseq
        %v1148 = vshrl.u32 %v1147, 7
        %v1149 = vsub.s32 %v1146, %v1148
        %v1150 = vrot.slane %v1143, %v1149
        %v1152 = vlaneseq
        %vm1153 = vcmp.ge.s32.totalorder %v1152, 0
        %vm1154 = vcmp.lt.s32.totalorder %v1152, 256
        %vm1155 = vmand %vm1153, %vm1154
        %1156 = vst.msk [vmem:[%s229] sm:$0x3] %vm1155, %v1150
        %s1157 = sand.u32 %s120, 1
        %s1158 = scalar_lea.sflag [#allocation3], %s1157
        %s1159 = sand.u32 %s120, 1
        %s1160 = smul.addr %s1159, 16
        %s1161 = scalar_lea.vmem [#allocation2], %s1160
        %s1162 = sand.u32 %s146, 1
        %s1163 = scalar_lea.sflag [#allocation5], %s1162
        %s1164 = sand.u32 %s146, 1
        %s1165 = smul.addr %s1164, 2
        %s1166 = scalar_lea.vmem [#allocation4], %s1165
        // Predicated region
        $region37: #{tpu_custom_call.1} parent=35 // pred_check
          %p1167 = pneg %p130
        $region38: #{tpu_custom_call.1} parent=35 // pred_check_branch
          %1169 = sbr.rel (%p1167) target = $region40
        $region39: #{tpu_custom_call.1} parent=35 // pred_region
          %s1170 = smul.u32 2, %s23
          %s1172 = ssub.s32 256, 256
          %1173 = vsyncadd %s1158, %s1172
          %s1174 = smul.addr %s1170, 128
          %s1175 = scalar_lea.hbm %s4, %s1174
          %s1177 = sshll.u32 %s1161, 4
          %s1178 = int_to_ptr.vmem [resolvable:$true] %s1177
          %1180 = dma.vmem_to_hbm [thread:$0]  %s1178, 256, %s1175, %s1158
        $region40: #{tpu_custom_call.1} parent=35 // pred_fallthru
          _
        // Predicated region
        $region41: #{tpu_custom_call.1} parent=35 // pred_check
          %p1181 = pneg %p156
        $region42: #{tpu_custom_call.1} parent=35 // pred_check_branch
          %1183 = sbr.rel (%p1181) target = $region44
        $region43: #{tpu_custom_call.1} parent=35 // pred_region
          %s1184 = smul.u32 2, %s23
          %s1186 = ssub.s32 32, 32
          %1187 = vsyncadd %s1163, %s1186
          %s1188 = smul.addr %s1184, 16
          %s1189 = scalar_lea.hbm %s5, %s1188
          %s1191 = sshll.u32 %s1166, 4
          %s1192 = int_to_ptr.vmem [resolvable:$true] %s1191
          %1194 = dma.vmem_to_hbm [thread:$0]  %s1192, 32, %s1189, %s1163
        $region44: #{tpu_custom_call.1} parent=35 // pred_fallthru
          _
      $region36: #{tpu_custom_call.1} parent=5 // pred_fallthru
        _
      %p1195 = scmp.le.s32.totalorder 2, %s18
      // Predicated region
      $region45: #{tpu_custom_call.1} parent=5 // pred_check
        %p1196 = pneg %p1195
      $region46: #{tpu_custom_call.1} parent=5 // pred_check_branch
        %1198 = sbr.rel (%p1196) target = $region48
      $region47: #{tpu_custom_call.1} parent=5 // pred_region
        %s1199 = ssub.s32 %s18, 2
        // Predicated region
        $region49: #{tpu_custom_call.1} parent=47 // pred_check
          %p1200 = pneg %p136
        $region50: #{tpu_custom_call.1} parent=47 // pred_check_branch
          %1202 = sbr.rel (%p1200) target = $region52
        $region51: #{tpu_custom_call.1} parent=47 // pred_region
          %s1203 = sand.u32 %s121, 1
          %s1204 = scalar_lea.sflag [#allocation3], %s1203
          %s1205 = sand.u32 %s121, 1
          %s1206 = smul.addr %s1205, 16
          %s1207 = scalar_lea.vmem [#allocation2], %s1206
          %1208 = dma.done %s1204, 256
        $region52: #{tpu_custom_call.1} parent=47 // pred_fallthru
          _
        // Predicated region
        $region53: #{tpu_custom_call.1} parent=47 // pred_check
          %p1209 = pneg %p162
        $region54: #{tpu_custom_call.1} parent=47 // pred_check_branch
          %1211 = sbr.rel (%p1209) target = $region56
        $region55: #{tpu_custom_call.1} parent=47 // pred_region
          %s1212 = sand.u32 %s147, 1
          %s1213 = scalar_lea.sflag [#allocation5], %s1212
          %s1214 = sand.u32 %s147, 1
          %s1215 = smul.addr %s1214, 2
          %s1216 = scalar_lea.vmem [#allocation4], %s1215
          %1217 = dma.done %s1213, 32
        $region56: #{tpu_custom_call.1} parent=47 // pred_fallthru
          _
      $region48: #{tpu_custom_call.1} parent=5 // pred_fallthru
        _
    $region6: #{tpu_custom_call.1} parent=1 // loop_footer
      %s22 = sadd.s32 1, %s18
    $region7: #{tpu_custom_call.1} parent=1 // loop_footer_branch
      %17 = sbr.rel target = $region3
    $region8: #{tpu_custom_call.1} parent=1 // loop_exit
      _
    %1218 = vsyncpa [#allocation3], 1
    %s1219 = scalar_lea.sflag [#allocation3], 1
    %1220 = vsyncpa %s1219, 1
    %1221 = vsyncpa [#allocation5], 1
    %s1222 = scalar_lea.sflag [#allocation5], 1
    %1223 = vsyncpa %s1222, 1

</llo_original>
